<compile_context>
chip_gen: v7x
topology: tpu7x:2x2x1
jax: 0.10.0
libtpu: 0.0.40
codegen_flags: <defaults>
</compile_context>

<pallas_src>
import functools

import jax
import jax.numpy as jnp
from jax import lax
from jax.experimental import pallas as pl
from jax.experimental.pallas import tpu as pltpu

MS_KS = 9

# VGG16-bn "features" with maxpools 33/43 removed and the last three convs dilated
# (dilation=2, padding=2), exactly as SCNN.net_init rewrites it.
# entries: ("conv", cin, cout, padding, dilation) | ("pool",)
VGG_CFG = [
    ("conv", 3, 64, 1, 1), ("conv", 64, 64, 1, 1), ("pool",),
    ("conv", 64, 128, 1, 1), ("conv", 128, 128, 1, 1), ("pool",),
    ("conv", 128, 256, 1, 1), ("conv", 256, 256, 1, 1), ("conv", 256, 256, 1, 1), ("pool",),
    ("conv", 256, 512, 1, 1), ("conv", 512, 512, 1, 1), ("conv", 512, 512, 1, 1),
    ("conv", 512, 512, 2, 2), ("conv", 512, 512, 2, 2), ("conv", 512, 512, 2, 2),
]


def _rup(v, m):
    return (v + m - 1) // m * m


# ----------------------------------------------------------------------------
# Pallas kernel 1: tiled matmul with fused bias + activation epilogue (MXU).
# bf16 operands by default, f32 accumulator, f32 epilogue.  K < 128 and N < 128
# are kept as full-dim blocks (no padding / slicing of the operands).
# ----------------------------------------------------------------------------
def _mm_kernel(a_ref, b_ref, bias_ref, o_ref, acc_ref, *, act):
    @pl.when(pl.program_id(2) == 0)
    def _():
        acc_ref[...] = jnp.zeros_like(acc_ref)

    acc_ref[...] += jnp.dot(a_ref[...], b_ref[...],
                            preferred_element_type=jnp.float32)

    @pl.when(pl.program_id(2) == pl.num_programs(2) - 1)
    def _():
        r = acc_ref[...] + bias_ref[...]
        if act == "relu":
            r = jnp.maximum(r, 0.0)
        elif act == "sigmoid":
            r = 1.0 / (1.0 + jnp.exp(-r))
        o_ref[...] = r.astype(o_ref.dtype)


def matmul(a, b, bias=None, act=None, out_dtype=jnp.float32,
           operand_dtype=jnp.bfloat16, tm=256, tn=256, tk=512):
    """(M,K) @ (K,N) + bias with optional relu/sigmoid, bf16 operands on the MXU."""
    M, K = a.shape
    K2, N = b.shape
    assert K == K2
    tm = min(tm, _rup(M, 8))
    tn = N if N <= 128 else min(tn, _rup(N, 128))
    tk = K if K <= 128 else min(tk, _rup(K, 128))
    Mp, Kp, Np = _rup(M, tm), _rup(K, tk), _rup(N, tn)

    a = a.astype(operand_dtype)
    b = b.astype(operand_dtype)
    if (Mp, Kp) != (M, K):          # only pad when a remainder tile exists
        a = jnp.pad(a, ((0, Mp - M), (0, Kp - K)))
    if (Kp, Np) != (K, N):
        b = jnp.pad(b, ((0, Kp - K), (0, Np - N)))
    bv = jnp.zeros((N,), jnp.float32) if bias is None else bias.astype(jnp.float32)
    if Np != N:
        bv = jnp.pad(bv, (0, Np - N))
    bias2d = bv.reshape(1, Np)

    out = pl.pallas_call(
        functools.partial(_mm_kernel, act=act),
        out_shape=jax.ShapeDtypeStruct((Mp, Np), out_dtype),
        grid=(Mp // tm, Np // tn, Kp // tk),
        in_specs=[
            pl.BlockSpec((tm, tk), lambda i, j, k: (i, k)),
            pl.BlockSpec((tk, tn), lambda i, j, k: (k, j)),
            pl.BlockSpec((1, tn), lambda i, j, k: (0, j)),
        ],
        out_specs=pl.BlockSpec((tm, tn), lambda i, j, k: (i, j)),
        scratch_shapes=[pltpu.VMEM((tm, tn), jnp.float32)],
        compiler_params=pltpu.CompilerParams(
            dimension_semantics=("parallel", "parallel", "arbitrary")),
    )(a, b, bias2d)
    if (Mp, Np) != (M, N):
        out = out[:M, :N]
    return out


# ----------------------------------------------------------------------------
# Pallas kernel 2: fused 3x3 / dilated conv (NHWC, stride 1), row-blocked.
#
#  halo mode:  grid=(N, Ho//TH).  The padded input is bound twice with plain
#              Blocked specs: a TH-row body block at block index t and a small
#              HB-row halo block at element offset (t+1)*TH (HB | TH, HB >= halo),
#              both copied once into a contiguous VMEM scratch.  Input HBM
#              re-read factor is (TH+HB)/TH instead of kh.
#  full mode:  when no valid (TH, HB) exists (halo taller than the image), the
#              whole padded image stays VMEM-resident (constant block index) and
#              only the output rows are blocked.
#
#  Per output row the kh*kw tap partial sums are accumulated in a local value
#  (single store to the output block per row, no scratch accumulator RMW).
# ----------------------------------------------------------------------------
def _conv_kernel(*refs, kh, kw, d, act, has_halo):
    if has_halo:
        xa_ref, xb_ref, w_ref, b_ref, o_ref, xw_ref = refs
        ta = xa_ref.shape[0]
        hb = xb_ref.shape[0]
        xw_ref[0:ta] = xa_ref[...]
        xw_ref[ta:ta + hb] = xb_ref[...]
        src = xw_ref
        base = 0
    else:
        x_ref, w_ref, b_ref, o_ref = refs
        src = x_ref
        base = pl.program_id(1) * o_ref.shape[0]

    th = o_ref.shape[0]
    wo = o_ref.shape[1]
    bias = b_ref[...]                       # (1, Cout) f32

    def row_fn(j, carry):
        acc = None
        for r in range(kh):
            xrow = src[base + j + r * d]    # (Wp, Cin) bf16
            for c in range(kw):
                lhs = xrow[c * d:c * d + wo, :]
                part = jnp.dot(lhs, w_ref[r * kw + c],
                               preferred_element_type=jnp.float32)
                acc = part if acc is None else acc + part
        res = acc + bias
        if act == "relu":
            res = jnp.maximum(res, 0.0)
        o_ref[j] = res.astype(o_ref.dtype)
        return carry

    if th <= 8:
        for j in range(th):                 # short, statically unrolled
            row_fn(j, 0)
    else:
        lax.fori_loop(0, th, row_fn, 0)


def _choose_row_block(ho, halo):
    """Pick (TH, HB): TH | Ho, HB | TH, halo <= HB <= TH.  None if impossible."""
    for th in range(min(ho, 16), 0, -1):
        if ho % th:
            continue
        for hb in range(halo, th + 1):
            if th % hb == 0:
                return th, hb
    return None, None


def _conv2d_fused(x, w, b, padding, dilation, act, out_dtype):
    # x: (N,H,W,Cin); w: (Cout,Cin,kh,kw) in PyTorch layout.
    N, H, W, Cin = x.shape
    Cout, _, kh, kw = w.shape
    p, d = padding, dilation
    halo = d * (kh - 1)
    Ho = H + 2 * p - halo
    Wo = W + 2 * p - d * (kw - 1)
    Wp = W + 2 * p

    th, hb = _choose_row_block(Ho, halo)
    has_halo = th is not None
    if has_halo:
        th_out = th
        pad_bot = p + (hb - halo)           # extra zero rows so the halo block exists
    else:
        pad_bot = p
        th_out = 1
        for t in range(min(Ho, 16), 0, -1):
            if Ho % t == 0:
                th_out = t
                break
    Hp = H + p + pad_bot

    # pad tiny Cin (first conv, Cin=3) to 8 so the MXU contraction dim is well formed
    Cin_p = Cin if Cin >= 8 else 8
    xp = jnp.pad(x.astype(jnp.bfloat16),
                 ((0, 0), (p, pad_bot), (p, p), (0, Cin_p - Cin)))
    wt = jnp.transpose(w, (2, 3, 1, 0)).reshape(kh * kw, Cin, Cout)
    if Cin_p != Cin:
        wt = jnp.pad(wt, ((0, 0), (0, Cin_p - Cin), (0, 0)))
    wt = wt.astype(jnp.bfloat16)
    bv = jnp.zeros((Cout,), jnp.float32) if b is None else b.astype(jnp.float32)
    bias2d = bv.reshape(1, Cout)

    if has_halo:
        in_specs = [
            pl.BlockSpec((None, th, Wp, Cin_p), lambda n, t: (n, t, 0, 0)),
            pl.BlockSpec((None, hb, Wp, Cin_p),
                         lambda n, t: (n, (t + 1) * (th // hb), 0, 0)),
            pl.BlockSpec((kh * kw, Cin_p, Cout), lambda n, t: (0, 0, 0)),
            pl.BlockSpec((1, Cout), lambda n, t: (0, 0)),
        ]
        operands = (xp, xp, wt, bias2d)
        scratch = [pltpu.VMEM((th + hb, Wp, Cin_p), jnp.bfloat16)]
        blk_in = (th + hb) * Wp * Cin_p * 2
        scr_bytes = blk_in
    else:
        in_specs = [
            pl.BlockSpec((None, Hp, Wp, Cin_p), lambda n, t: (n, 0, 0, 0)),
            pl.BlockSpec((kh * kw, Cin_p, Cout), lambda n, t: (0, 0, 0)),
            pl.BlockSpec((1, Cout), lambda n, t: (0, 0)),
        ]
        operands = (xp, wt, bias2d)
        scratch = []
        blk_in = Hp * Wp * Cin_p * 2
        scr_bytes = 0

    blk_w = kh * kw * Cin_p * Cout * 2
    blk_out = th_out * Wo * Cout * jnp.dtype(out_dtype).itemsize
    need = 2 * (blk_in + blk_w + blk_out) + scr_bytes + 2 * Wo * Cout * 4
    vmem_limit = int(min(64 * 1024 * 1024,
                         max(32 * 1024 * 1024, need * 3 // 2 + (2 << 20))))

    out = pl.pallas_call(
        functools.partial(_conv_kernel, kh=kh, kw=kw, d=d, act=act,
                          has_halo=has_halo),
        out_shape=jax.ShapeDtypeStruct((N, Ho, Wo, Cout), out_dtype),
        grid=(N, Ho // th_out),
        in_specs=in_specs,
        out_specs=pl.BlockSpec((None, th_out, Wo, Cout), lambda n, t: (n, t, 0, 0)),
        scratch_shapes=scratch,
        compiler_params=pltpu.CompilerParams(
            dimension_semantics=("parallel", "parallel"),
            vmem_limit_bytes=vmem_limit),
    )(*operands)
    return out


def conv2d(x, w, b, padding=0, dilation=1, act=None, out_dtype=jnp.bfloat16):
    N, H, W, Cin = x.shape
    Cout, _, kh, kw = w.shape
    if kh == 1 and kw == 1 and padding == 0:
        # 1x1 conv == plain matmul over all spatial positions (best MXU tiling).
        wm = jnp.transpose(w.reshape(Cout, Cin), (1, 0))
        out = matmul(x.reshape(N * H * W, Cin), wm, bias=b, act=act,
                     out_dtype=out_dtype)
        return out.reshape(N, H, W, Cout)
    return _conv2d_fused(x, w, b, padding, dilation, act, out_dtype)


# ----------------------------------------------------------------------------
# Pallas kernel 3: SCNN directional message passing (sequential recurrence).
#   out[i] = x[i] + relu(conv1d_ms_ks(out[i-1]))
# Persistent zero-halo VMEM scratch (bf16) holds the previous output row; only
# its middle is overwritten each step.  Recurrence dots run bf16 on the MXU
# with f32 accumulation; the state x / out stays f32.
# TODO(synk): on v7x (2 TCs) the non-recurrent spatial axis could be split across
# cores with a halo exchange; kept single-core here.
# ----------------------------------------------------------------------------
def _mp_kernel(x_ref, w_ref, o_ref, pbuf, *, reverse, ms_ks):
    L, M, C = x_ref.shape
    half = ms_ks // 2
    i0 = L - 1 if reverse else 0

    pbuf[...] = jnp.zeros_like(pbuf)          # zero the halo (and middle) once
    first = x_ref[i0]
    o_ref[i0] = first
    pbuf[pl.ds(half, M), :] = first.astype(jnp.bfloat16)

    def body(j, carry):
        i = (L - 1 - j) if reverse else j
        acc = None
        for k in range(ms_ks):
            part = jnp.dot(pbuf[pl.ds(k, M), :], w_ref[k],
                           preferred_element_type=jnp.float32)
            acc = part if acc is None else acc + part
        new = x_ref[i] + jnp.maximum(acc, 0.0)
        o_ref[i] = new
        pbuf[pl.ds(half, M), :] = new.astype(jnp.bfloat16)
        return carry

    lax.fori_loop(1, L, body, 0)


def message_pass(x, w9, reverse):
    # x: (N, L, M, C) f32; w9: (MS_KS, Cin, Cout)
    N, L, M, C = x.shape
    ms_ks = w9.shape[0]
    half = ms_ks // 2
    return pl.pallas_call(
        functools.partial(_mp_kernel, reverse=reverse, ms_ks=ms_ks),
        out_shape=jax.ShapeDtypeStruct((N, L, M, C), jnp.float32),
        grid=(N,),
        in_specs=[
            pl.BlockSpec((None, L, M, C), lambda n: (n, 0, 0, 0)),
            pl.BlockSpec((ms_ks, C, C), lambda n: (0, 0, 0)),
        ],
        out_specs=pl.BlockSpec((None, L, M, C), lambda n: (n, 0, 0, 0)),
        scratch_shapes=[pltpu.VMEM((M + 2 * half, C), jnp.bfloat16)],
        compiler_params=pltpu.CompilerParams(dimension_semantics=("parallel",)),
    )(x.astype(jnp.float32), w9.astype(jnp.bfloat16))


# ----------------------------------------------------------------------------
# Pallas kernels 4/5: row-blocked 2x2 pooling directly on NHWC blocks
# (max, or channel-softmax followed by 2x2 mean).  Grid = (N, (H/2)/T).
# ----------------------------------------------------------------------------
def _pool_rows(h2):
    for t in range(min(h2, 8), 0, -1):
        if h2 % t == 0:
            return t
    return 1


def _maxpool_kernel(x_ref, o_ref):
    T, Wh, C = o_ref.shape
    for t in range(T):
        m = jnp.maximum(x_ref[2 * t], x_ref[2 * t + 1])     # (W, C)
        m2 = m.reshape(Wh, 2, C)
        o_ref[t] = jnp.maximum(m2[:, 0, :], m2[:, 1, :])


def maxpool2x2(x):
    N, H, W, C = x.shape
    T = _pool_rows(H // 2)
    return pl.pallas_call(
        _maxpool_kernel,
        out_shape=jax.ShapeDtypeStruct((N, H // 2, W // 2, C), x.dtype),
        grid=(N, (H // 2) // T),
        in_specs=[pl.BlockSpec((None, 2 * T, W, C), lambda n, t: (n, t, 0, 0))],
        out_specs=pl.BlockSpec((None, T, W // 2, C), lambda n, t: (n, t, 0, 0)),
        compiler_params=pltpu.CompilerParams(
            dimension_semantics=("parallel", "parallel")),
    )(x)


def _softmax_pool_kernel(x_ref, o_ref):
    T, Wh, C = o_ref.shape

    def sm(v):
        m = jnp.max(v, axis=-1, keepdims=True)
        e = jnp.exp(v - m)
        return e / jnp.sum(e, axis=-1, keepdims=True)

    for t in range(T):
        a = x_ref[2 * t].astype(jnp.float32)                # (W, C)
        b = x_ref[2 * t + 1].astype(jnp.float32)
        s = sm(a) + sm(b)
        s2 = s.reshape(Wh, 2, C)
        o_ref[t] = (s2[:, 0, :] + s2[:, 1, :]) * 0.25


def softmax_avgpool2x2(x):
    N, H, W, C = x.shape
    T = _pool_rows(H // 2)
    return pl.pallas_call(
        _softmax_pool_kernel,
        out_shape=jax.ShapeDtypeStruct((N, H // 2, W // 2, C), jnp.float32),
        grid=(N, (H // 2) // T),
        in_specs=[pl.BlockSpec((None, 2 * T, W, C), lambda n, t: (n, t, 0, 0))],
        out_specs=pl.BlockSpec((None, T, W // 2, C), lambda n, t: (n, t, 0, 0)),
        compiler_params=pltpu.CompilerParams(
            dimension_semantics=("parallel", "parallel")),
    )(x)


# ----------------------------------------------------------------------------
# Bilinear x8 upsampling (align_corners=True) as two Pallas matmuls with
# precomputed interpolation matrices (kept in f32 — final seg head, tiny).
# ----------------------------------------------------------------------------
def _interp_matrix(out_size, in_size):
    if in_size == 1:
        return jnp.ones((out_size, 1), jnp.float32)
    pos = jnp.arange(out_size, dtype=jnp.float32) * (in_size - 1) / (out_size - 1)
    i0 = jnp.clip(jnp.floor(pos), 0, in_size - 2).astype(jnp.int32)
    frac = pos - i0.astype(jnp.float32)
    return (jax.nn.one_hot(i0, in_size, dtype=jnp.float32) * (1.0 - frac)[:, None]
            + jax.nn.one_hot(i0 + 1, in_size, dtype=jnp.float32) * frac[:, None])


def upsample_bilinear_x8(x):
    # F.interpolate(scale_factor=8, mode='bilinear', align_corners=True)
    N, h, w, C = x.shape
    H, W = 8 * h, 8 * w
    Ah = _interp_matrix(H, h)
    Aw = _interp_matrix(W, w)
    xm = jnp.transpose(x, (1, 0, 2, 3)).reshape(h, N * w * C)
    y = matmul(Ah, xm, operand_dtype=jnp.float32).reshape(H, N, w, C)
    y = jnp.transpose(y, (1, 0, 2, 3))                                   # along H
    ym = jnp.transpose(y, (2, 0, 1, 3)).reshape(w, N * H * C)
    z = matmul(Aw, ym, operand_dtype=jnp.float32).reshape(W, N, H, C)
    z = jnp.transpose(z, (1, 2, 0, 3))                                   # along W
    return z


# ----------------------------------------------------------------------------
# Deterministic parameter initialization (BatchNorm folded into conv w/b).
# ----------------------------------------------------------------------------
def _norm(key, shape, std):
    return jax.random.normal(key, shape, jnp.float32) * std


def _fold_bn(w, b, gamma, beta, mean, var, eps=1e-5):
    s = gamma / jnp.sqrt(var + eps)
    return w * s[:, None, None, None], (b - mean) * s + beta


def init_params(seed, input_size, ms_ks=MS_KS):
    input_w, input_h = input_size
    base = jax.random.PRNGKey(seed)
    ctr = [0]

    def nk():
        ctr[0] += 1
        return jax.random.fold_in(base, ctr[0])

    # TODO(synk): torchvision pretrained VGG16-bn weights replaced with
    # deterministic He-initialized weights (synthetic kernel, no checkpoint load).
    backbone = []
    for item in VGG_CFG:
        if item[0] != "conv":
            continue
        _, cin, cout, _, _ = item
        w = _norm(nk(), (cout, cin, 3, 3), (2.0 / (cin * 9)) ** 0.5)
        b = _norm(nk(), (cout,), 0.01)
        gamma = 1.0 + _norm(nk(), (cout,), 0.05)
        beta = _norm(nk(), (cout,), 0.05)
        mean = _norm(nk(), (cout,), 0.05)
        var = jnp.ones((cout,), jnp.float32)
        backbone.append(_fold_bn(w, b, gamma, beta, mean, var))

    # layer1: Conv(512->1024, 3x3, pad 4, dil 4, no bias)+BN+ReLU, Conv(1024->128,1x1)+ReLU
    w = _norm(nk(), (1024, 512, 3, 3), (2.0 / (512 * 9)) ** 0.5)
    gamma = 1.0 + _norm(nk(), (1024,), 0.05)
    beta = _norm(nk(), (1024,), 0.05)
    mean = _norm(nk(), (1024,), 0.05)
    var = jnp.ones((1024,), jnp.float32)
    l1_w1, l1_b1 = _fold_bn(w, jnp.zeros((1024,), jnp.float32), gamma, beta, mean, var)
    l1_w2 = _norm(nk(), (128, 1024, 1, 1), (2.0 / 1024) ** 0.5)

    # message-passing convs (bias=False): (1,ms_ks) vertical, (ms_ks,1) horizontal,
    # stored as (ms_ks, Cin, Cout) for the Pallas recurrence kernel.
    def mp_weight(vertical):
        shape = (128, 128, 1, ms_ks) if vertical else (128, 128, ms_ks, 1)
        w = _norm(nk(), shape, (2.0 / (128 * ms_ks)) ** 0.5)
        w = w[:, :, 0, :] if vertical else w[:, :, :, 0]
        return jnp.transpose(w, (2, 1, 0))

    mp_ud, mp_du = mp_weight(True), mp_weight(True)
    mp_lr, mp_rl = mp_weight(False), mp_weight(False)

    # layer2: Dropout2d(0.1) [identity at inference] + Conv(128->5, 1x1, bias)
    l2_w = _norm(nk(), (5, 128, 1, 1), (1.0 / 128) ** 0.5)
    l2_b = _norm(nk(), (5,), 0.01)

    # fc: Linear(fc_in->128)+ReLU, Linear(128->4)+Sigmoid
    fc_in = 5 * (input_w // 16) * (input_h // 16)
    fc1_w = _norm(nk(), (128, fc_in), (1.0 / fc_in) ** 0.5)
    fc1_b = _norm(nk(), (128,), 0.01)
    fc2_w = _norm(nk(), (4, 128), (1.0 / 128) ** 0.5)
    fc2_b = _norm(nk(), (4,), 0.01)

    return dict(backbone=backbone, l1_w1=l1_w1, l1_b1=l1_b1, l1_w2=l1_w2,
                mp_ud=mp_ud, mp_du=mp_du, mp_lr=mp_lr, mp_rl=mp_rl,
                l2_w=l2_w, l2_b=l2_b,
                fc1_w=fc1_w, fc1_b=fc1_b, fc2_w=fc2_w, fc2_b=fc2_b)


# ----------------------------------------------------------------------------
# SCNN forward (inference path, seg_img / exist_gt = None)
# ----------------------------------------------------------------------------
def scnn_forward(params, img):
    # img: (N, 3, H, W) NCHW, H and W divisible by 16.
    x = jnp.transpose(img, (0, 2, 3, 1)).astype(jnp.float32)   # -> NHWC

    ci = 0
    for item in VGG_CFG:
        if item[0] == "conv":
            _, _, _, pad, dil = item
            w, b = params["backbone"][ci]
            ci += 1
            x = conv2d(x, w, b, padding=pad, dilation=dil, act="relu",
                       out_dtype=jnp.bfloat16)
        else:
            x = maxpool2x2(x)

    # layer1
    x = conv2d(x, params["l1_w1"], params["l1_b1"], padding=4, dilation=4,
               act="relu", out_dtype=jnp.bfloat16)
    x = conv2d(x, params["l1_w2"], None, padding=0, dilation=1, act="relu",
               out_dtype=jnp.float32)

    # SCNN spatial message passing: up_down, down_up, left_right, right_left.
    x = message_pass(x, params["mp_ud"], reverse=False)        # recurrence over H
    x = message_pass(x, params["mp_du"], reverse=True)
    xt = jnp.transpose(x, (0, 2, 1, 3))                        # (N, W, H, C)
    xt = message_pass(xt, params["mp_lr"], reverse=False)      # recurrence over W
    xt = message_pass(xt, params["mp_rl"], reverse=True)
    x = jnp.transpose(xt, (0, 2, 1, 3))

    # layer2: Dropout2d is identity at inference; 1x1 conv to 5 classes (f32 head)
    x = conv2d(x, params["l2_w"], params["l2_b"], padding=0, dilation=1,
               act=None, out_dtype=jnp.float32)

    # seg head: bilinear x8 upsample (align_corners=True), returned as NCHW
    seg_pred = jnp.transpose(upsample_bilinear_x8(x), (0, 3, 1, 2))

    # layer3: Softmax(dim=channel) + AvgPool2d(2,2); flatten in PyTorch (C,H,W) order
    pooled = softmax_avgpool2x2(x)                             # (N, H/16, W/16, 5)
    flat = jnp.transpose(pooled, (0, 3, 1, 2)).reshape(pooled.shape[0], -1)
    h = matmul(flat, params["fc1_w"].T, bias=params["fc1_b"], act="relu")
    exist_pred = matmul(h, params["fc2_w"].T, bias=params["fc2_b"], act="sigmoid")

    # TODO(synk): CrossEntropy/BCE loss branch needs labels; with seg_img=None the
    # reference returns zero losses, reproduced here.
    zero = jnp.zeros((), img.dtype)
    return seg_pred, exist_pred, zero, zero, zero


if __name__ == "__main__":
    H = W = 32                       # small shape; must be divisible by 16
    key = jax.random.PRNGKey(0)
    params = init_params(0, (W, H))
    img = jax.random.normal(key, (2, 3, H, W), jnp.float32)

    # --- quick fused-conv correctness checks vs XLA conv (bf16-rounded operands) ---
    def conv_ref(x, w, b, p, d, act):
        xb = x.astype(jnp.bfloat16).astype(jnp.float32)
        wb = w.astype(jnp.bfloat16).astype(jnp.float32)
        out = lax.conv_general_dilated(
            jnp.transpose(xb, (0, 3, 1, 2)), wb, (1, 1),
            [(p, p), (p, p)], rhs_dilation=(d, d))
        out = jnp.transpose(out, (0, 2, 3, 1)) + b.reshape(1, 1, 1, -1)
        return jnp.maximum(out, 0.0) if act == "relu" else out

    checks = [
        ((1, 12, 16, 16), (24, 16, 3, 3), 2, 2),   # halo mode, dilation 2
        ((1, 4, 8, 16), (24, 16, 3, 3), 4, 4),     # full-resident mode (halo > H)
        ((1, 8, 8, 3), (16, 3, 3, 3), 1, 1),       # tiny-Cin channel-pad path
    ]
    for i, (xs, ws, p, d) in enumerate(checks):
        kx = jax.random.fold_in(key, 100 + i)
        xc = jax.random.normal(kx, xs, jnp.float32)
        wc = jax.random.normal(jax.random.fold_in(kx, 1), ws, jnp.float32) * 0.1
        bc = jax.random.normal(jax.random.fold_in(kx, 2), (ws[0],), jnp.float32) * 0.1
        got = conv2d(xc, wc, bc, padding=p, dilation=d, act="relu",
                     out_dtype=jnp.float32)
        ref = conv_ref(xc, wc, bc, p, d, "relu")
        assert got.shape == ref.shape
        assert jnp.allclose(got, ref, rtol=2e-2, atol=2e-2), (
            f"conv check {i} mismatch, max err "
            f"{float(jnp.max(jnp.abs(got - ref)))}")

    # --- full forward pass ---
    fwd = jax.jit(scnn_forward)
    seg_pred, exist_pred, loss_seg, loss_exist, loss = fwd(params, img)
    jax.block_until_ready((seg_pred, exist_pred, loss_seg, loss_exist, loss))

    assert seg_pred.shape == (2, 5, H, W)
    assert exist_pred.shape == (2, 4)
    assert bool(jnp.isfinite(seg_pred).all())
    assert bool(jnp.isfinite(exist_pred).all())
    print("KERNEL_OK")
</pallas_src>

<mosaic_0001>
module attributes {stable_mosaic.version = 11 : i64} {
  func.func @_conv_kernel(%arg0: i32, %arg1: i32, %arg2: memref<1x12x20x16xbf16, #tpu.memory_space<vmem>>, %arg3: memref<1x4x20x16xbf16, #tpu.memory_space<vmem>>, %arg4: memref<9x16x24xbf16, #tpu.memory_space<vmem>>, %arg5: memref<1x24xf32, #tpu.memory_space<vmem>>, %arg6: memref<1x12x16x24xf32, #tpu.memory_space<vmem>>, %arg7: memref<16x20x16xbf16, #tpu.memory_space<vmem>>) attributes {dimension_semantics = [#tpu.dimension_semantics<parallel>, #tpu.dimension_semantics<parallel>], iteration_bounds = array<i64: 1, 1>, scalar_prefetch = 0 : i64, scratch_operands = 1 : i64, tpu.core_type = #tpu.core_type<tc>, window_params = [{transform_indices = @transform_0, window_bounds = array<i64: 1, 12, 20, 16>}, {transform_indices = @transform_1, window_bounds = array<i64: 1, 4, 20, 16>}, {pipeline_mode = #tpu.pipeline_mode<synchronous>, transform_indices = @transform_2, window_bounds = array<i64: 9, 16, 24>}, {pipeline_mode = #tpu.pipeline_mode<synchronous>, transform_indices = @transform_3, window_bounds = array<i64: 1, 24>}, {transform_indices = @transform_4, window_bounds = array<i64: 1, 12, 16, 24>}]} {
    %c0 = arith.constant 0 : index
    %c0_0 = arith.constant 0 : index
    %c0_1 = arith.constant 0 : index
    %c0_2 = arith.constant 0 : index
    %0 = vector.load %arg2[%c0, %c0_0, %c0_1, %c0_2] : memref<1x12x20x16xbf16, #tpu.memory_space<vmem>>, vector<1x12x20x16xbf16>
    %1 = vector.shape_cast %0 : vector<1x12x20x16xbf16> to vector<12x20x16xbf16>
    %c0_3 = arith.constant 0 : index
    %c0_4 = arith.constant 0 : index
    %c0_5 = arith.constant 0 : index
    %2 = vector.load %arg7[%c0_3, %c0_4, %c0_5] : memref<16x20x16xbf16, #tpu.memory_space<vmem>>, vector<12x20x16xbf16>
    tpu.vector_store %arg7[%c0_3, %c0_4, %c0_5], %1 {strides = array<i32>} : memref<16x20x16xbf16, #tpu.memory_space<vmem>>, vector<12x20x16xbf16>,
    %c0_6 = arith.constant 0 : index
    %c0_7 = arith.constant 0 : index
    %c0_8 = arith.constant 0 : index
    %c0_9 = arith.constant 0 : index
    %3 = vector.load %arg3[%c0_6, %c0_7, %c0_8, %c0_9] : memref<1x4x20x16xbf16, #tpu.memory_space<vmem>>, vector<1x4x20x16xbf16>
    %4 = vector.shape_cast %3 : vector<1x4x20x16xbf16> to vector<4x20x16xbf16>
    %c12 = arith.constant 12 : index
    %c0_10 = arith.constant 0 : index
    %c0_11 = arith.constant 0 : index
    %5 = vector.load %arg7[%c12, %c0_10, %c0_11] : memref<16x20x16xbf16, #tpu.memory_space<vmem>>, vector<4x20x16xbf16>
    tpu.vector_store %arg7[%c12, %c0_10, %c0_11], %4 {strides = array<i32>} : memref<16x20x16xbf16, #tpu.memory_space<vmem>>, vector<4x20x16xbf16>,
    %c0_12 = arith.constant 0 : index
    %c0_13 = arith.constant 0 : index
    %6 = vector.load %arg5[%c0_12, %c0_13] : memref<1x24xf32, #tpu.memory_space<vmem>>, vector<1x24xf32>
    %c0_i32 = arith.constant 0 : i32
    %c12_i32 = arith.constant 12 : i32
    %7 = arith.addi %c0_i32, %c12_i32 : i32
    %c1_i32 = arith.constant 1 : i32
    scf.for %arg8 = %c0_i32 to %7 step %c1_i32  : i32 {
      %c0_i32_15 = arith.constant 0 : i32
      %8 = arith.addi %c0_i32_15, %arg8 : i32
      %c0_i32_16 = arith.constant 0 : i32
      %9 = arith.addi %8, %c0_i32_16 : i32
      %10 = arith.index_cast %9 : i32 to index
      %c0_17 = arith.constant 0 : index
      %c0_18 = arith.constant 0 : index
      %11 = vector.load %arg7[%10, %c0_17, %c0_18] : memref<16x20x16xbf16, #tpu.memory_space<vmem>>, vector<1x20x16xbf16>
      %12 = vector.shape_cast %11 : vector<1x20x16xbf16> to vector<20x16xbf16>
      %13 = vector.extract_strided_slice %12 {offsets = [0, 0], sizes = [16, 16], strides = [1, 1]} : vector<20x16xbf16> to vector<16x16xbf16>
      %c0_19 = arith.constant 0 : index
      %c0_20 = arith.constant 0 : index
      %c0_21 = arith.constant 0 : index
      %14 = vector.load %arg4[%c0_19, %c0_20, %c0_21] : memref<9x16x24xbf16, #tpu.memory_space<vmem>>, vector<1x16x24xbf16>
      %15 = vector.shape_cast %14 : vector<1x16x24xbf16> to vector<16x24xbf16>
      %cst = arith.constant dense<0.000000e+00> : vector<16x24xf32>
      %16 = tpu.matmul %13, %15, %cst {dimension_numbers = #tpu.dot_dimension_numbers<[1], [0], [0], [1], [0, 0, 1, 1], [], []>} : vector<16x16xbf16>, vector<16x24xbf16>, vector<16x24xf32> -> vector<16x24xf32>
      %17 = vector.extract_strided_slice %12 {offsets = [2, 0], sizes = [16, 16], strides = [1, 1]} : vector<20x16xbf16> to vector<16x16xbf16>
      %c1 = arith.constant 1 : index
      %c0_22 = arith.constant 0 : index
      %c0_23 = arith.constant 0 : index
      %18 = vector.load %arg4[%c1, %c0_22, %c0_23] : memref<9x16x24xbf16, #tpu.memory_space<vmem>>, vector<1x16x24xbf16>
      %19 = vector.shape_cast %18 : vector<1x16x24xbf16> to vector<16x24xbf16>
      %cst_24 = arith.constant dense<0.000000e+00> : vector<16x24xf32>
      %20 = tpu.matmul %17, %19, %cst_24 {dimension_numbers = #tpu.dot_dimension_numbers<[1], [0], [0], [1], [0, 0, 1, 1], [], []>} : vector<16x16xbf16>, vector<16x24xbf16>, vector<16x24xf32> -> vector<16x24xf32>
      %21 = arith.addf %16, %20 : vector<16x24xf32>
      %22 = vector.extract_strided_slice %12 {offsets = [4, 0], sizes = [16, 16], strides = [1, 1]} : vector<20x16xbf16> to vector<16x16xbf16>
      %c2 = arith.constant 2 : index
      %c0_25 = arith.constant 0 : index
      %c0_26 = arith.constant 0 : index
      %23 = vector.load %arg4[%c2, %c0_25, %c0_26] : memref<9x16x24xbf16, #tpu.memory_space<vmem>>, vector<1x16x24xbf16>
      %24 = vector.shape_cast %23 : vector<1x16x24xbf16> to vector<16x24xbf16>
      %cst_27 = arith.constant dense<0.000000e+00> : vector<16x24xf32>
      %25 = tpu.matmul %22, %24, %cst_27 {dimension_numbers = #tpu.dot_dimension_numbers<[1], [0], [0], [1], [0, 0, 1, 1], [], []>} : vector<16x16xbf16>, vector<16x24xbf16>, vector<16x24xf32> -> vector<16x24xf32>
      %26 = arith.addf %21, %25 : vector<16x24xf32>
      %c0_i32_28 = arith.constant 0 : i32
      %27 = arith.addi %c0_i32_28, %arg8 : i32
      %c2_i32 = arith.constant 2 : i32
      %28 = arith.addi %27, %c2_i32 : i32
      %29 = arith.index_cast %28 : i32 to index
      %c0_29 = arith.constant 0 : index
      %c0_30 = arith.constant 0 : index
      %30 = vector.load %arg7[%29, %c0_29, %c0_30] : memref<16x20x16xbf16, #tpu.memory_space<vmem>>, vector<1x20x16xbf16>
      %31 = vector.shape_cast %30 : vector<1x20x16xbf16> to vector<20x16xbf16>
      %32 = vector.extract_strided_slice %31 {offsets = [0, 0], sizes = [16, 16], strides = [1, 1]} : vector<20x16xbf16> to vector<16x16xbf16>
      %c3 = arith.constant 3 : index
      %c0_31 = arith.constant 0 : index
      %c0_32 = arith.constant 0 : index
      %33 = vector.load %arg4[%c3, %c0_31, %c0_32] : memref<9x16x24xbf16, #tpu.memory_space<vmem>>, vector<1x16x24xbf16>
      %34 = vector.shape_cast %33 : vector<1x16x24xbf16> to vector<16x24xbf16>
      %cst_33 = arith.constant dense<0.000000e+00> : vector<16x24xf32>
      %35 = tpu.matmul %32, %34, %cst_33 {dimension_numbers = #tpu.dot_dimension_numbers<[1], [0], [0], [1], [0, 0, 1, 1], [], []>} : vector<16x16xbf16>, vector<16x24xbf16>, vector<16x24xf32> -> vector<16x24xf32>
      %36 = arith.addf %26, %35 : vector<16x24xf32>
      %37 = vector.extract_strided_slice %31 {offsets = [2, 0], sizes = [16, 16], strides = [1, 1]} : vector<20x16xbf16> to vector<16x16xbf16>
      %c4 = arith.constant 4 : index
      %c0_34 = arith.constant 0 : index
      %c0_35 = arith.constant 0 : index
      %38 = vector.load %arg4[%c4, %c0_34, %c0_35] : memref<9x16x24xbf16, #tpu.memory_space<vmem>>, vector<1x16x24xbf16>
      %39 = vector.shape_cast %38 : vector<1x16x24xbf16> to vector<16x24xbf16>
      %cst_36 = arith.constant dense<0.000000e+00> : vector<16x24xf32>
      %40 = tpu.matmul %37, %39, %cst_36 {dimension_numbers = #tpu.dot_dimension_numbers<[1], [0], [0], [1], [0, 0, 1, 1], [], []>} : vector<16x16xbf16>, vector<16x24xbf16>, vector<16x24xf32> -> vector<16x24xf32>
      %41 = arith.addf %36, %40 : vector<16x24xf32>
      %42 = vector.extract_strided_slice %31 {offsets = [4, 0], sizes = [16, 16], strides = [1, 1]} : vector<20x16xbf16> to vector<16x16xbf16>
      %c5 = arith.constant 5 : index
      %c0_37 = arith.constant 0 : index
      %c0_38 = arith.constant 0 : index
      %43 = vector.load %arg4[%c5, %c0_37, %c0_38] : memref<9x16x24xbf16, #tpu.memory_space<vmem>>, vector<1x16x24xbf16>
      %44 = vector.shape_cast %43 : vector<1x16x24xbf16> to vector<16x24xbf16>
      %cst_39 = arith.constant dense<0.000000e+00> : vector<16x24xf32>
      %45 = tpu.matmul %42, %44, %cst_39 {dimension_numbers = #tpu.dot_dimension_numbers<[1], [0], [0], [1], [0, 0, 1, 1], [], []>} : vector<16x16xbf16>, vector<16x24xbf16>, vector<16x24xf32> -> vector<16x24xf32>
      %46 = arith.addf %41, %45 : vector<16x24xf32>
      %c0_i32_40 = arith.constant 0 : i32
      %47 = arith.addi %c0_i32_40, %arg8 : i32
      %c4_i32 = arith.constant 4 : i32
      %48 = arith.addi %47, %c4_i32 : i32
      %49 = arith.index_cast %48 : i32 to index
      %c0_41 = arith.constant 0 : index
      %c0_42 = arith.constant 0 : index
      %50 = vector.load %arg7[%49, %c0_41, %c0_42] : memref<16x20x16xbf16, #tpu.memory_space<vmem>>, vector<1x20x16xbf16>
      %51 = vector.shape_cast %50 : vector<1x20x16xbf16> to vector<20x16xbf16>
      %52 = vector.extract_strided_slice %51 {offsets = [0, 0], sizes = [16, 16], strides = [1, 1]} : vector<20x16xbf16> to vector<16x16xbf16>
      %c6 = arith.constant 6 : index
      %c0_43 = arith.constant 0 : index
      %c0_44 = arith.constant 0 : index
      %53 = vector.load %arg4[%c6, %c0_43, %c0_44] : memref<9x16x24xbf16, #tpu.memory_space<vmem>>, vector<1x16x24xbf16>
      %54 = vector.shape_cast %53 : vector<1x16x24xbf16> to vector<16x24xbf16>
      %cst_45 = arith.constant dense<0.000000e+00> : vector<16x24xf32>
      %55 = tpu.matmul %52, %54, %cst_45 {dimension_numbers = #tpu.dot_dimension_numbers<[1], [0], [0], [1], [0, 0, 1, 1], [], []>} : vector<16x16xbf16>, vector<16x24xbf16>, vector<16x24xf32> -> vector<16x24xf32>
      %56 = arith.addf %46, %55 : vector<16x24xf32>
      %57 = vector.extract_strided_slice %51 {offsets = [2, 0], sizes = [16, 16], strides = [1, 1]} : vector<20x16xbf16> to vector<16x16xbf16>
      %c7 = arith.constant 7 : index
      %c0_46 = arith.constant 0 : index
      %c0_47 = arith.constant 0 : index
      %58 = vector.load %arg4[%c7, %c0_46, %c0_47] : memref<9x16x24xbf16, #tpu.memory_space<vmem>>, vector<1x16x24xbf16>
      %59 = vector.shape_cast %58 : vector<1x16x24xbf16> to vector<16x24xbf16>
      %cst_48 = arith.constant dense<0.000000e+00> : vector<16x24xf32>
      %60 = tpu.matmul %57, %59, %cst_48 {dimension_numbers = #tpu.dot_dimension_numbers<[1], [0], [0], [1], [0, 0, 1, 1], [], []>} : vector<16x16xbf16>, vector<16x24xbf16>, vector<16x24xf32> -> vector<16x24xf32>
      %61 = arith.addf %56, %60 : vector<16x24xf32>
      %62 = vector.extract_strided_slice %51 {offsets = [4, 0], sizes = [16, 16], strides = [1, 1]} : vector<20x16xbf16> to vector<16x16xbf16>
      %c8 = arith.constant 8 : index
      %c0_49 = arith.constant 0 : index
      %c0_50 = arith.constant 0 : index
      %63 = vector.load %arg4[%c8, %c0_49, %c0_50] : memref<9x16x24xbf16, #tpu.memory_space<vmem>>, vector<1x16x24xbf16>
      %64 = vector.shape_cast %63 : vector<1x16x24xbf16> to vector<16x24xbf16>
      %cst_51 = arith.constant dense<0.000000e+00> : vector<16x24xf32>
      %65 = tpu.matmul %62, %64, %cst_51 {dimension_numbers = #tpu.dot_dimension_numbers<[1], [0], [0], [1], [0, 0, 1, 1], [], []>} : vector<16x16xbf16>, vector<16x24xbf16>, vector<16x24xf32> -> vector<16x24xf32>
      %66 = arith.addf %61, %65 : vector<16x24xf32>
      %67 = vector.broadcast %6 : vector<1x24xf32> to vector<16x24xf32>
      %68 = arith.addf %66, %67 : vector<16x24xf32>
      %cst_52 = arith.constant 0.000000e+00 : f32
      %69 = vector.broadcast %cst_52 : f32 to vector<16x24xf32>
      %70 = arith.maximumf %68, %69 : vector<16x24xf32>
      %c0_53 = arith.constant 0 : index
      %71 = arith.index_cast %arg8 : i32 to index
      %c0_54 = arith.constant 0 : index
      %c0_55 = arith.constant 0 : index
      %72 = vector.load %arg6[%c0_53, %71, %c0_54, %c0_55] : memref<1x12x16x24xf32, #tpu.memory_space<vmem>>, vector<1x1x16x24xf32>
      %73 = vector.shape_cast %72 : vector<1x1x16x24xf32> to vector<16x24xf32>
      %74 = vector.shape_cast %70 : vector<16x24xf32> to vector<1x1x16x24xf32>
      tpu.vector_store %arg6[%c0_53, %71, %c0_54, %c0_55], %74 {strides = array<i32>} : memref<1x12x16x24xf32, #tpu.memory_space<vmem>>, vector<1x1x16x24xf32>,
    }
    %c12_i32_14 = arith.constant 12 : i32
    return
  }
  func.func @transform_0(%arg0: i32, %arg1: i32) -> (i32, i32, i32, i32) {
    %c0_i32 = arith.constant 0 : i32
    %c0_i32_0 = arith.constant 0 : i32
    %c0_i32_1 = arith.constant 0 : i32
    return %arg0, %arg1, %c0_i32, %c0_i32_0 : i32, i32, i32, i32
  }
  func.func @transform_1(%arg0: i32, %arg1: i32) -> (i32, i32, i32, i32) {
    %c1_i32 = arith.constant 1 : i32
    %0 = arith.addi %arg1, %c1_i32 : i32
    %c3_i32 = arith.constant 3 : i32
    %1 = arith.muli %0, %c3_i32 : i32
    %c0_i32 = arith.constant 0 : i32
    %c0_i32_0 = arith.constant 0 : i32
    %c0_i32_1 = arith.constant 0 : i32
    return %arg0, %1, %c0_i32, %c0_i32_0 : i32, i32, i32, i32
  }
  func.func @transform_2(%arg0: i32, %arg1: i32) -> (i32, i32, i32) {
    %c0_i32 = arith.constant 0 : i32
    %c0_i32_0 = arith.constant 0 : i32
    %c0_i32_1 = arith.constant 0 : i32
    %c0_i32_2 = arith.constant 0 : i32
    return %c0_i32, %c0_i32_0, %c0_i32_1 : i32, i32, i32
  }
  func.func @transform_3(%arg0: i32, %arg1: i32) -> (i32, i32) {
    %c0_i32 = arith.constant 0 : i32
    %c0_i32_0 = arith.constant 0 : i32
    %c0_i32_1 = arith.constant 0 : i32
    return %c0_i32, %c0_i32_0 : i32, i32
  }
  func.func @transform_4(%arg0: i32, %arg1: i32) -> (i32, i32, i32, i32) {
    %c0_i32 = arith.constant 0 : i32
    %c0_i32_0 = arith.constant 0 : i32
    %c0_i32_1 = arith.constant 0 : i32
    return %arg0, %arg1, %c0_i32, %c0_i32_0 : i32, i32, i32, i32
  }
}

</mosaic_0001>

<llo_original>
// kernel: tpu_custom_call.1
$region0: #{tpu_custom_call.1}
  #allocation0 [shape = 'u32[]', space=smem, size = 0x4, offset = 0x4, fixed_abs, tag = 'smem constant byte address 0x4 - core index']
  #allocation1 [shape = 'u32[144,128]{1,0:T(1,128)}', space=vmem, size = 0x12000, scoped, tag = 'internal scratch']
  #allocation2 [shape = 'bf16[16,20,16]{2,1,0:T(8,128)(2,1)}', space=vmem, size = 0x18000, scoped, tag = 'scratch operand']
  %s0 = inlined_call_operand.vmem [shape: bf16[1,16,20,16], index: 0, kind: input, shape index: {}]
  %s1 = inlined_call_operand.vmem [shape: bf16[1,16,20,16], index: 1, kind: input, shape index: {}]
  %s2 = inlined_call_operand.vmem [shape: bf16[9,16,24], index: 2, kind: input, shape index: {}]
  %s3 = inlined_call_operand.vmem [shape: f32[1,24], index: 3, kind: input, shape index: {}]
  %s4 = inlined_call_operand.hbm [shape: f32[1,12,16,24], index: 4, kind: output, shape index: {}]
  %s5 = sld [smem:[#allocation0]]
  $region33: #{tpu_custom_call.1} parent=0
    _
  %s7 = ssub.s32 1, %s5
  %s8 = scalar_select 0, %s7, %s5
  $region1: #{tpu_custom_call.1} parent=0
    #allocation3 [shape = 'u8[98304]{0}', space=vmem, size = 0x18000, scoped, tag = 'output window, operand 0, single buffered']
    #allocation4 [shape = 's32[1]{0}', space=sflag, size = 0x4, scoped, tag = 'scoped memory for tpu_custom_call.1']
    %9 = vsyncpa [#allocation4], 0
    // Predicated region
    $region2: #{tpu_custom_call.1} parent=1 // pred_check
      _
    $region3: #{tpu_custom_call.1} parent=1 // pred_check_branch
      %11 = sbr.rel (0) target = $region5
    $region4: #{tpu_custom_call.1} parent=1 // pred_region
      _
    $region5: #{tpu_custom_call.1} parent=1 // pred_fallthru
      _
    // Predicated region
    $region6: #{tpu_custom_call.1} parent=1 // pred_check
      _
    $region7: #{tpu_custom_call.1} parent=1 // pred_check_branch
      %13 = sbr.rel (0) target = $region9
    $region8: #{tpu_custom_call.1} parent=1 // pred_region
      %s14 = sadd.s32 0, 1
      %s15 = smul.u32 %s14, 3
      %s16 = smul.u32 4, %s15
      %p17 = scmp.lt.s32.totalorder %s16, 15
      %s18 = scalar_select %p17, %s16, 15
      %s19 = smul.addr %s18, 3
      %s20 = smul.addr %s19, 4
      %s21 = scalar_lea.vmem %s1, %s20
      %s22 = sadd.s32 0, 1
      %s23 = smul.u32 %s22, 3
      %s24 = smul.u32 4, %s23
    $region9: #{tpu_custom_call.1} parent=1 // pred_fallthru
      _
    // Predicated region
    $region10: #{tpu_custom_call.1} parent=1 // pred_check
      _
    $region11: #{tpu_custom_call.1} parent=1 // pred_check_branch
      %26 = sbr.rel (0) target = $region13
    $region12: #{tpu_custom_call.1} parent=1 // pred_region
      _
    $region13: #{tpu_custom_call.1} parent=1 // pred_fallthru
      _
    // Predicated region
    $region14: #{tpu_custom_call.1} parent=1 // pred_check
      _
    $region15: #{tpu_custom_call.1} parent=1 // pred_check_branch
      %28 = sbr.rel (0) target = $region17
    $region16: #{tpu_custom_call.1} parent=1 // pred_region
      _
    $region17: #{tpu_custom_call.1} parent=1 // pred_fallthru
      _
    %s29 = sadd.s32 0, 1
    %s30 = smul.u32 %s29, 3
    %s31 = smul.u32 4, %s30
    %p32 = scmp.lt.s32.totalorder %s31, 15
    %s33 = scalar_select %p32, %s31, 15
    %s34 = smul.addr %s33, 3
    %s35 = smul.addr %s34, 4
    %s36 = scalar_lea.vmem %s1, %s35
    %s37 = sadd.s32 0, 1
    %s38 = smul.u32 %s37, 3
    %s39 = smul.u32 4, %s38
    %p40 = scmp.lt.s32.totalorder %s39, 15
    %s41 = scalar_select %p40, %s39, 15
    %s42 = smul.addr %s41, 3
    %s43 = smul.addr %s42, 4
    %s44 = scalar_lea.vmem %s1, %s43
    %s45 = sadd.s32 0, 1
    %s46 = smul.u32 %s45, 3
    %s47 = smul.u32 4, %s46
    %v49 = vld [vmem:[%s0] sm:$0xf]
    %v50 = vld [vmem:[%s0 + $0x4] sm:$0xf]
    %v51 = vld [vmem:[%s0 + $0x8] sm:$0x3]
    %v52 = vld [vmem:[%s0 + $0xc] sm:$0xf]
    %v53 = vld [vmem:[%s0 + $0x10] sm:$0xf]
    %v54 = vld [vmem:[%s0 + $0x14] sm:$0x3]
    %v55 = vld [vmem:[%s0 + $0x18] sm:$0xf]
    %v56 = vld [vmem:[%s0 + $0x1c] sm:$0xf]
    %v57 = vld [vmem:[%s0 + $0x20] sm:$0x3]
    %v58 = vld [vmem:[%s0 + $0x24] sm:$0xf]
    %v59 = vld [vmem:[%s0 + $0x28] sm:$0xf]
    %v60 = vld [vmem:[%s0 + $0x2c] sm:$0x3]
    %v61 = vld [vmem:[%s0 + $0x30] sm:$0xf]
    %v62 = vld [vmem:[%s0 + $0x34] sm:$0xf]
    %v63 = vld [vmem:[%s0 + $0x38] sm:$0x3]
    %v64 = vld [vmem:[%s0 + $0x3c] sm:$0xf]
    %v65 = vld [vmem:[%s0 + $0x40] sm:$0xf]
    %v66 = vld [vmem:[%s0 + $0x44] sm:$0x3]
    %v67 = vld [vmem:[%s0 + $0x48] sm:$0xf]
    %v68 = vld [vmem:[%s0 + $0x4c] sm:$0xf]
    %v69 = vld [vmem:[%s0 + $0x50] sm:$0x3]
    %v70 = vld [vmem:[%s0 + $0x54] sm:$0xf]
    %v71 = vld [vmem:[%s0 + $0x58] sm:$0xf]
    %v72 = vld [vmem:[%s0 + $0x5c] sm:$0x3]
    %v73 = vld [vmem:[%s0 + $0x60] sm:$0xf]
    %v74 = vld [vmem:[%s0 + $0x64] sm:$0xf]
    %v75 = vld [vmem:[%s0 + $0x68] sm:$0x3]
    %v76 = vld [vmem:[%s0 + $0x6c] sm:$0xf]
    %v77 = vld [vmem:[%s0 + $0x70] sm:$0xf]
    %v78 = vld [vmem:[%s0 + $0x74] sm:$0x3]
    %v79 = vld [vmem:[%s0 + $0x78] sm:$0xf]
    %v80 = vld [vmem:[%s0 + $0x7c] sm:$0xf]
    %v81 = vld [vmem:[%s0 + $0x80] sm:$0x3]
    %v82 = vld [vmem:[%s0 + $0x84] sm:$0xf]
    %v83 = vld [vmem:[%s0 + $0x88] sm:$0xf]
    %v84 = vld [vmem:[%s0 + $0x8c] sm:$0x3]
    %vm85 = vcmask 125952
    %86 = vst.msk [vmem:[#allocation2] sm:$0xf] %vm85, %v49
    %87 = vst.msk [vmem:[#allocation2 + $0x4] sm:$0xf] %vm85, %v50
    %vm88 = vcmask 123904
    %89 = vst.msk [vmem:[#allocation2 + $0x8] sm:$0x3] %vm88, %v51
    %90 = vst.msk [vmem:[#allocation2 + $0xc] sm:$0xf] %vm85, %v52
    %91 = vst.msk [vmem:[#allocation2 + $0x10] sm:$0xf] %vm85, %v53
    %92 = vst.msk [vmem:[#allocation2 + $0x14] sm:$0x3] %vm88, %v54
    %93 = vst.msk [vmem:[#allocation2 + $0x18] sm:$0xf] %vm85, %v55
    %94 = vst.msk [vmem:[#allocation2 + $0x1c] sm:$0xf] %vm85, %v56
    %95 = vst.msk [vmem:[#allocation2 + $0x20] sm:$0x3] %vm88, %v57
    %96 = vst.msk [vmem:[#allocation2 + $0x24] sm:$0xf] %vm85, %v58
    %97 = vst.msk [vmem:[#allocation2 + $0x28] sm:$0xf] %vm85, %v59
    %98 = vst.msk [vmem:[#allocation2 + $0x2c] sm:$0x3] %vm88, %v60
    %99 = vst.msk [vmem:[#allocation2 + $0x30] sm:$0xf] %vm85, %v61
    %100 = vst.msk [vmem:[#allocation2 + $0x34] sm:$0xf] %vm85, %v62
    %101 = vst.msk [vmem:[#allocation2 + $0x38] sm:$0x3] %vm88, %v63
    %102 = vst.msk [vmem:[#allocation2 + $0x3c] sm:$0xf] %vm85, %v64
    %103 = vst.msk [vmem:[#allocation2 + $0x40] sm:$0xf] %vm85, %v65
    %104 = vst.msk [vmem:[#allocation2 + $0x44] sm:$0x3] %vm88, %v66
    %105 = vst.msk [vmem:[#allocation2 + $0x48] sm:$0xf] %vm85, %v67
    %106 = vst.msk [vmem:[#allocation2 + $0x4c] sm:$0xf] %vm85, %v68
    %107 = vst.msk [vmem:[#allocation2 + $0x50] sm:$0x3] %vm88, %v69
    %108 = vst.msk [vmem:[#allocation2 + $0x54] sm:$0xf] %vm85, %v70
    %109 = vst.msk [vmem:[#allocation2 + $0x58] sm:$0xf] %vm85, %v71
    %110 = vst.msk [vmem:[#allocation2 + $0x5c] sm:$0x3] %vm88, %v72
    %111 = vst.msk [vmem:[#allocation2 + $0x60] sm:$0xf] %vm85, %v73
    %112 = vst.msk [vmem:[#allocation2 + $0x64] sm:$0xf] %vm85, %v74
    %113 = vst.msk [vmem:[#allocation2 + $0x68] sm:$0x3] %vm88, %v75
    %114 = vst.msk [vmem:[#allocation2 + $0x6c] sm:$0xf] %vm85, %v76
    %115 = vst.msk [vmem:[#allocation2 + $0x70] sm:$0xf] %vm85, %v77
    %116 = vst.msk [vmem:[#allocation2 + $0x74] sm:$0x3] %vm88, %v78
    %117 = vst.msk [vmem:[#allocation2 + $0x78] sm:$0xf] %vm85, %v79
    %118 = vst.msk [vmem:[#allocation2 + $0x7c] sm:$0xf] %vm85, %v80
    %119 = vst.msk [vmem:[#allocation2 + $0x80] sm:$0x3] %vm88, %v81
    %120 = vst.msk [vmem:[#allocation2 + $0x84] sm:$0xf] %vm85, %v82
    %121 = vst.msk [vmem:[#allocation2 + $0x88] sm:$0xf] %vm85, %v83
    %122 = vst.msk [vmem:[#allocation2 + $0x8c] sm:$0x3] %vm88, %v84
    %v123 = vld [vmem:[%s44] sm:$0xf]
    %v124 = vld [vmem:[%s44 + $0x4] sm:$0xf]
    %v125 = vld [vmem:[%s44 + $0x8] sm:$0x3]
    %v126 = vld [vmem:[%s44 + $0xc] sm:$0xf]
    %v127 = vld [vmem:[%s44 + $0x10] sm:$0xf]
    %v128 = vld [vmem:[%s44 + $0x14] sm:$0x3]
    %v129 = vld [vmem:[%s44 + $0x18] sm:$0xf]
    %v130 = vld [vmem:[%s44 + $0x1c] sm:$0xf]
    %v131 = vld [vmem:[%s44 + $0x20] sm:$0x3]
    %v132 = vld [vmem:[%s44 + $0x24] sm:$0xf]
    %v133 = vld [vmem:[%s44 + $0x28] sm:$0xf]
    %v134 = vld [vmem:[%s44 + $0x2c] sm:$0x3]
    %s135 = scalar_lea.vmem [#allocation2], 144
    %136 = vst.msk [vmem:[%s135] sm:$0xf] %vm85, %v123
    %137 = vst.msk [vmem:[%s135 + $0x4] sm:$0xf] %vm85, %v124
    %138 = vst.msk [vmem:[%s135 + $0x8] sm:$0x3] %vm88, %v125
    %139 = vst.msk [vmem:[%s135 + $0xc] sm:$0xf] %vm85, %v126
    %140 = vst.msk [vmem:[%s135 + $0x10] sm:$0xf] %vm85, %v127
    %141 = vst.msk [vmem:[%s135 + $0x14] sm:$0x3] %vm88, %v128
    %142 = vst.msk [vmem:[%s135 + $0x18] sm:$0xf] %vm85, %v129
    %143 = vst.msk [vmem:[%s135 + $0x1c] sm:$0xf] %vm85, %v130
    %144 = vst.msk [vmem:[%s135 + $0x20] sm:$0x3] %vm88, %v131
    %145 = vst.msk [vmem:[%s135 + $0x24] sm:$0xf] %vm85, %v132
    %146 = vst.msk [vmem:[%s135 + $0x28] sm:$0xf] %vm85, %v133
    %147 = vst.msk [vmem:[%s135 + $0x2c] sm:$0x3] %vm88, %v134
    %v148 = vld [vmem:[%s3] sm:$0x1]
    loop: start=0, step=1, limit=12
    $region18: #{tpu_custom_call.1} parent=1 // loop_pre_header
      _
    $region19: #{tpu_custom_call.1} parent=1 // loop_header
      %s150 = sphi 0, %s154
      %p151 = scmp.ge.s32.totalorder %s150, 12
    $region20: #{tpu_custom_call.1} parent=1 // loop_header_branch
      %153 = sbr.rel (%p151) target = $region24
    $region21: #{tpu_custom_call.1} parent=1 // loop_body
      %s155 = smul.u32 %s150, 3
      %s156 = smul.addr %s155, 4
      %s157 = scalar_lea.vmem [#allocation2], %s156
      %v158 = vld [vmem:[%s157] sm:$0xf]
      %v159 = vld [vmem:[%s157 + $0x4] sm:$0xf]
      %v160 = vld [vmem:[%s157 + $0x8] sm:$0x3]
      %v161 = vld [vmem:[%s2] sm:$0xf]
      %v162 = vld [vmem:[%s2 + $0x4] sm:$0xf]
      %s163 = scalar_lea.vmem %s2, 8
      %v164 = vld [vmem:[%s163] sm:$0xf]
      %v165 = vld [vmem:[%s163 + $0x4] sm:$0xf]
      %v169 = vunpack.c.l.b16 %v158
      %v170 = vunpack.c.l.b16 %v159
      %v171 = vunpack.c.l.b16 %v160
      %v172 = vpack.c.b16 %v170, %v169
      %v173 = vpack.c.b16 %v171, %v171
      %vm174 = vcmask 1046528
      %v175 = vrot.slane %v172, 1
      %v176 = vrot.slane %v173, 1
      %v177 = vsel %vm174, %v175, %v176
      %v180 = vunpack.c.l.b16 %v164
      %v181 = vunpack.c.l.b16 %v165
      %v182 = vpack.c.b16 %v181, %v180
      %vm184 = vcmask 130048
      %v186 = vsel %vm184, %v177, 0
      %188 = vmatprep.subr.bf16.mxu0 0
      %189 = vmatpush1.bf16.msra.mxu0 %v182
      %190 = vmatprep.subr.bf16.mxu0 0
      %191 = vmatpush1.bf16.msra.mxu0 0
      %192 = vmatprep.subr.bf16.mxu0 0
      %193 = vmatpush1.bf16.msra.mxu0 0
      %194 = vmatprep.subr.bf16.mxu0 0
      %195 = vmatpush1.bf16.msra.mxu0 0
      %196 = vmatprep.subr.bf16.mxu0 0
      %197 = vmatpush1.bf16.msra.mxu0 0
      %198 = vmatprep.subr.bf16.mxu0 0
      %199 = vmatpush1.bf16.msra.mxu0 0
      %200 = vmatprep.subr.bf16.mxu0 0
      %201 = vmatpush1.bf16.msra.mxu0 0
      %202 = vmatprep.subr.bf16.mxu0 0
      %203 = vmatpush1.bf16.msra.mxu0 0
      %204 = vmatprep.subr.bf16.mxu0 0
      %205 = vmatpush1.bf16.msra.mxu0 0
      %206 = vmatprep.subr.bf16.mxu0 0
      %207 = vmatpush1.bf16.msra.mxu0 0
      %208 = vmatprep.subr.bf16.mxu0 0
      %209 = vmatpush1.bf16.msra.mxu0 0
      %210 = vmatprep.subr.bf16.mxu0 0
      %211 = vmatpush1.bf16.msra.mxu0 0
      %212 = vmatprep.subr.bf16.mxu0 0
      %213 = vmatpush1.bf16.msra.mxu0 0
      %214 = vmatprep.subr.bf16.mxu0 0
      %215 = vmatpush1.bf16.msra.mxu0 0
      %216 = vmatprep.subr.bf16.mxu0 0
      %217 = vmatpush1.bf16.msra.mxu0 0
      %218 = vmatprep.subr.bf16.mxu0 0
      %219 = vmatpush1.bf16.msra.mxu0 0
      %220 = vmatprep.mubr.bf16.mxu0 0
      %221 = vmatmul.mubr.bf16.gmra.mrb[0].mxu0 %v186
      %v222 = vpop.f32.mrb[0].mxu0
      %v223 = vadd.f32 0.0, %v222
      %v224 = vpop.f32.mrb[0].mxu0
      %v225 = vpop.f32.mrb[0].mxu0
      %v226 = vadd.f32 0.0, %v225
      %v227 = vpop.f32.mrb[0].mxu0
      %228 = vdwg.mxu0
      %v231 = vunpack.c.l.b16 %v161
      %v232 = vunpack.c.l.b16 %v162
      %v233 = vpack.c.b16 %v232, %v231
      %v236 = vsel %vm184, %v172, 0
      %238 = vmatprep.subr.bf16.mxu0 0
      %239 = vmatpush1.bf16.msra.mxu0 %v233
      %240 = vmatprep.subr.bf16.mxu0 0
      %241 = vmatpush1.bf16.msra.mxu0 0
      %242 = vmatprep.subr.bf16.mxu0 0
      %243 = vmatpush1.bf16.msra.mxu0 0
      %244 = vmatprep.subr.bf16.mxu0 0
      %245 = vmatpush1.bf16.msra.mxu0 0
      %246 = vmatprep.subr.bf16.mxu0 0
      %247 = vmatpush1.bf16.msra.mxu0 0
      %248 = vmatprep.subr.bf16.mxu0 0
      %249 = vmatpush1.bf16.msra.mxu0 0
      %250 = vmatprep.subr.bf16.mxu0 0
      %251 = vmatpush1.bf16.msra.mxu0 0
      %252 = vmatprep.subr.bf16.mxu0 0
      %253 = vmatpush1.bf16.msra.mxu0 0
      %254 = vmatprep.subr.bf16.mxu0 0
      %255 = vmatpush1.bf16.msra.mxu0 0
      %256 = vmatprep.subr.bf16.mxu0 0
      %257 = vmatpush1.bf16.msra.mxu0 0
      %258 = vmatprep.subr.bf16.mxu0 0
      %259 = vmatpush1.bf16.msra.mxu0 0
      %260 = vmatprep.subr.bf16.mxu0 0
      %261 = vmatpush1.bf16.msra.mxu0 0
      %262 = vmatprep.subr.bf16.mxu0 0
      %263 = vmatpush1.bf16.msra.mxu0 0
      %264 = vmatprep.subr.bf16.mxu0 0
      %265 = vmatpush1.bf16.msra.mxu0 0
      %266 = vmatprep.subr.bf16.mxu0 0
      %267 = vmatpush1.bf16.msra.mxu0 0
      %268 = vmatprep.subr.bf16.mxu0 0
      %269 = vmatpush1.bf16.msra.mxu0 0
      %270 = vmatprep.mubr.bf16.mxu0 0
      %271 = vmatmul.mubr.bf16.gmra.mrb[0].mxu0 %v236
      %v272 = vpop.f32.mrb[0].mxu0
      %v273 = vadd.f32 %v223, %v272
      %v274 = vpop.f32.mrb[0].mxu0
      %v275 = vpop.f32.mrb[0].mxu0
      %v276 = vadd.f32 %v226, %v275
      %v277 = vpop.f32.mrb[0].mxu0
      %278 = vdwg.mxu0
      %s279 = scalar_lea.vmem %s2, 16
      %v280 = vld [vmem:[%s279] sm:$0xf]
      %v281 = vld [vmem:[%s279 + $0x4] sm:$0xf]
      %vm282 = vcmask 1045504
      %v283 = vrot.slane %v172, 2
      %v284 = vrot.slane %v173, 2
      %v285 = vsel %vm282, %v283, %v284
      %v288 = vunpack.c.l.b16 %v280
      %v289 = vunpack.c.l.b16 %v281
      %v290 = vpack.c.b16 %v289, %v288
      %v293 = vsel %vm184, %v285, 0
      %295 = vmatprep.subr.bf16.mxu0 0
      %296 = vmatpush1.bf16.msra.mxu0 %v290
      %297 = vmatprep.subr.bf16.mxu0 0
      %298 = vmatpush1.bf16.msra.mxu0 0
      %299 = vmatprep.subr.bf16.mxu0 0
      %300 = vmatpush1.bf16.msra.mxu0 0
      %301 = vmatprep.subr.bf16.mxu0 0
      %302 = vmatpush1.bf16.msra.mxu0 0
      %303 = vmatprep.subr.bf16.mxu0 0
      %304 = vmatpush1.bf16.msra.mxu0 0
      %305 = vmatprep.subr.bf16.mxu0 0
      %306 = vmatpush1.bf16.msra.mxu0 0
      %307 = vmatprep.subr.bf16.mxu0 0
      %308 = vmatpush1.bf16.msra.mxu0 0
      %309 = vmatprep.subr.bf16.mxu0 0
      %310 = vmatpush1.bf16.msra.mxu0 0
      %311 = vmatprep.subr.bf16.mxu0 0
      %312 = vmatpush1.bf16.msra.mxu0 0
      %313 = vmatprep.subr.bf16.mxu0 0
      %314 = vmatpush1.bf16.msra.mxu0 0
      %315 = vmatprep.subr.bf16.mxu0 0
      %316 = vmatpush1.bf16.msra.mxu0 0
      %317 = vmatprep.subr.bf16.mxu0 0
      %318 = vmatpush1.bf16.msra.mxu0 0
      %319 = vmatprep.subr.bf16.mxu0 0
      %320 = vmatpush1.bf16.msra.mxu0 0
      %321 = vmatprep.subr.bf16.mxu0 0
      %322 = vmatpush1.bf16.msra.mxu0 0
      %323 = vmatprep.subr.bf16.mxu0 0
      %324 = vmatpush1.bf16.msra.mxu0 0
      %325 = vmatprep.subr.bf16.mxu0 0
      %326 = vmatpush1.bf16.msra.mxu0 0
      %327 = vmatprep.mubr.bf16.mxu0 0
      %328 = vmatmul.mubr.bf16.gmra.mrb[0].mxu0 %v293
      %v329 = vpop.f32.mrb[0].mxu0
      %v330 = vadd.f32 0.0, %v329
      %v331 = vpop.f32.mrb[0].mxu0
      %v332 = vpop.f32.mrb[0].mxu0
      %v333 = vadd.f32 0.0, %v332
      %v334 = vpop.f32.mrb[0].mxu0
      %335 = vdwg.mxu0
      %v336 = vadd.f32 %v273, %v330
      %v337 = vadd.f32 %v276, %v333
      %s338 = sadd.s32 %s150, 2
      %s339 = smul.u32 %s338, 3
      %s340 = smul.addr %s339, 4
      %s341 = scalar_lea.vmem [#allocation2], %s340
      %v342 = vld [vmem:[%s341] sm:$0xf]
      %v343 = vld [vmem:[%s341 + $0x4] sm:$0xf]
      %v344 = vld [vmem:[%s341 + $0x8] sm:$0x3]
      %s345 = scalar_lea.vmem %s2, 24
      %v346 = vld [vmem:[%s345] sm:$0xf]
      %v347 = vld [vmem:[%s345 + $0x4] sm:$0xf]
      %v350 = vunpack.c.l.b16 %v342
      %v351 = vunpack.c.l.b16 %v343
      %v352 = vpack.c.b16 %v351, %v350
      %v355 = vunpack.c.l.b16 %v346
      %v356 = vunpack.c.l.b16 %v347
      %v357 = vpack.c.b16 %v356, %v355
      %v360 = vsel %vm184, %v352, 0
      %362 = vmatprep.subr.bf16.mxu0 0
      %363 = vmatpush1.bf16.msra.mxu0 %v357
      %364 = vmatprep.subr.bf16.mxu0 0
      %365 = vmatpush1.bf16.msra.mxu0 0
      %366 = vmatprep.subr.bf16.mxu0 0
      %367 = vmatpush1.bf16.msra.mxu0 0
      %368 = vmatprep.subr.bf16.mxu0 0
      %369 = vmatpush1.bf16.msra.mxu0 0
      %370 = vmatprep.subr.bf16.mxu0 0
      %371 = vmatpush1.bf16.msra.mxu0 0
      %372 = vmatprep.subr.bf16.mxu0 0
      %373 = vmatpush1.bf16.msra.mxu0 0
      %374 = vmatprep.subr.bf16.mxu0 0
      %375 = vmatpush1.bf16.msra.mxu0 0
      %376 = vmatprep.subr.bf16.mxu0 0
      %377 = vmatpush1.bf16.msra.mxu0 0
      %378 = vmatprep.subr.bf16.mxu0 0
      %379 = vmatpush1.bf16.msra.mxu0 0
      %380 = vmatprep.subr.bf16.mxu0 0
      %381 = vmatpush1.bf16.msra.mxu0 0
      %382 = vmatprep.subr.bf16.mxu0 0
      %383 = vmatpush1.bf16.msra.mxu0 0
      %384 = vmatprep.subr.bf16.mxu0 0
      %385 = vmatpush1.bf16.msra.mxu0 0
      %386 = vmatprep.subr.bf16.mxu0 0
      %387 = vmatpush1.bf16.msra.mxu0 0
      %388 = vmatprep.subr.bf16.mxu0 0
      %389 = vmatpush1.bf16.msra.mxu0 0
      %390 = vmatprep.subr.bf16.mxu0 0
      %391 = vmatpush1.bf16.msra.mxu0 0
      %392 = vmatprep.subr.bf16.mxu0 0
      %393 = vmatpush1.bf16.msra.mxu0 0
      %394 = vmatprep.mubr.bf16.mxu0 0
      %395 = vmatmul.mubr.bf16.gmra.mrb[0].mxu0 %v360
      %v396 = vpop.f32.mrb[0].mxu0
      %v397 = vadd.f32 0.0, %v396
      %v398 = vpop.f32.mrb[0].mxu0
      %v399 = vpop.f32.mrb[0].mxu0
      %v400 = vadd.f32 0.0, %v399
      %v401 = vpop.f32.mrb[0].mxu0
      %402 = vdwg.mxu0
      %v403 = vadd.f32 %v336, %v397
      %v404 = vadd.f32 %v337, %v400
      %s405 = scalar_lea.vmem %s2, 32
      %v406 = vld [vmem:[%s405] sm:$0xf]
      %v407 = vld [vmem:[%s405 + $0x4] sm:$0xf]
      %v409 = vunpack.c.l.b16 %v344
      %v410 = vpack.c.b16 %v409, %v409
      %v411 = vrot.slane %v352, 1
      %v412 = vrot.slane %v410, 1
      %v413 = vsel %vm174, %v411, %v412
      %v416 = vunpack.c.l.b16 %v406
      %v417 = vunpack.c.l.b16 %v407
      %v418 = vpack.c.b16 %v417, %v416
      %v421 = vsel %vm184, %v413, 0
      %423 = vmatprep.subr.bf16.mxu0 0
      %424 = vmatpush1.bf16.msra.mxu0 %v418
      %425 = vmatprep.subr.bf16.mxu0 0
      %426 = vmatpush1.bf16.msra.mxu0 0
      %427 = vmatprep.subr.bf16.mxu0 0
      %428 = vmatpush1.bf16.msra.mxu0 0
      %429 = vmatprep.subr.bf16.mxu0 0
      %430 = vmatpush1.bf16.msra.mxu0 0
      %431 = vmatprep.subr.bf16.mxu0 0
      %432 = vmatpush1.bf16.msra.mxu0 0
      %433 = vmatprep.subr.bf16.mxu0 0
      %434 = vmatpush1.bf16.msra.mxu0 0
      %435 = vmatprep.subr.bf16.mxu0 0
      %436 = vmatpush1.bf16.msra.mxu0 0
      %437 = vmatprep.subr.bf16.mxu0 0
      %438 = vmatpush1.bf16.msra.mxu0 0
      %439 = vmatprep.subr.bf16.mxu0 0
      %440 = vmatpush1.bf16.msra.mxu0 0
      %441 = vmatprep.subr.bf16.mxu0 0
      %442 = vmatpush1.bf16.msra.mxu0 0
      %443 = vmatprep.subr.bf16.mxu0 0
      %444 = vmatpush1.bf16.msra.mxu0 0
      %445 = vmatprep.subr.bf16.mxu0 0
      %446 = vmatpush1.bf16.msra.mxu0 0
      %447 = vmatprep.subr.bf16.mxu0 0
      %448 = vmatpush1.bf16.msra.mxu0 0
      %449 = vmatprep.subr.bf16.mxu0 0
      %450 = vmatpush1.bf16.msra.mxu0 0
      %451 = vmatprep.subr.bf16.mxu0 0
      %452 = vmatpush1.bf16.msra.mxu0 0
      %453 = vmatprep.subr.bf16.mxu0 0
      %454 = vmatpush1.bf16.msra.mxu0 0
      %455 = vmatprep.mubr.bf16.mxu0 0
      %456 = vmatmul.mubr.bf16.gmra.mrb[0].mxu0 %v421
      %v457 = vpop.f32.mrb[0].mxu0
      %v458 = vadd.f32 0.0, %v457
      %v459 = vpop.f32.mrb[0].mxu0
      %v460 = vpop.f32.mrb[0].mxu0
      %v461 = vadd.f32 0.0, %v460
      %v462 = vpop.f32.mrb[0].mxu0
      %463 = vdwg.mxu0
      %v464 = vadd.f32 %v403, %v458
      %v465 = vadd.f32 %v404, %v461
      %s466 = scalar_lea.vmem %s2, 40
      %v467 = vld [vmem:[%s466] sm:$0xf]
      %v468 = vld [vmem:[%s466 + $0x4] sm:$0xf]
      %v469 = vrot.slane %v352, 2
      %v470 = vrot.slane %v410, 2
      %v471 = vsel %vm282, %v469, %v470
      %v474 = vunpack.c.l.b16 %v467
      %v475 = vunpack.c.l.b16 %v468
      %v476 = vpack.c.b16 %v475, %v474
      %v479 = vsel %vm184, %v471, 0
      %481 = vmatprep.subr.bf16.mxu0 0
      %482 = vmatpush1.bf16.msra.mxu0 %v476
      %483 = vmatprep.subr.bf16.mxu0 0
      %484 = vmatpush1.bf16.msra.mxu0 0
      %485 = vmatprep.subr.bf16.mxu0 0
      %486 = vmatpush1.bf16.msra.mxu0 0
      %487 = vmatprep.subr.bf16.mxu0 0
      %488 = vmatpush1.bf16.msra.mxu0 0
      %489 = vmatprep.subr.bf16.mxu0 0
      %490 = vmatpush1.bf16.msra.mxu0 0
      %491 = vmatprep.subr.bf16.mxu0 0
      %492 = vmatpush1.bf16.msra.mxu0 0
      %493 = vmatprep.subr.bf16.mxu0 0
      %494 = vmatpush1.bf16.msra.mxu0 0
      %495 = vmatprep.subr.bf16.mxu0 0
      %496 = vmatpush1.bf16.msra.mxu0 0
      %497 = vmatprep.subr.bf16.mxu0 0
      %498 = vmatpush1.bf16.msra.mxu0 0
      %499 = vmatprep.subr.bf16.mxu0 0
      %500 = vmatpush1.bf16.msra.mxu0 0
      %501 = vmatprep.subr.bf16.mxu0 0
      %502 = vmatpush1.bf16.msra.mxu0 0
      %503 = vmatprep.subr.bf16.mxu0 0
      %504 = vmatpush1.bf16.msra.mxu0 0
      %505 = vmatprep.subr.bf16.mxu0 0
      %506 = vmatpush1.bf16.msra.mxu0 0
      %507 = vmatprep.subr.bf16.mxu0 0
      %508 = vmatpush1.bf16.msra.mxu0 0
      %509 = vmatprep.subr.bf16.mxu0 0
      %510 = vmatpush1.bf16.msra.mxu0 0
      %511 = vmatprep.subr.bf16.mxu0 0
      %512 = vmatpush1.bf16.msra.mxu0 0
      %513 = vmatprep.mubr.bf16.mxu0 0
      %514 = vmatmul.mubr.bf16.gmra.mrb[0].mxu0 %v479
      %v515 = vpop.f32.mrb[0].mxu0
      %v516 = vadd.f32 0.0, %v515
      %v517 = vpop.f32.mrb[0].mxu0
      %v518 = vpop.f32.mrb[0].mxu0
      %v519 = vadd.f32 0.0, %v518
      %v520 = vpop.f32.mrb[0].mxu0
      %521 = vdwg.mxu0
      %v522 = vadd.f32 %v464, %v516
      %v523 = vadd.f32 %v465, %v519
      %s524 = sadd.s32 %s150, 4
      %s525 = smul.u32 %s524, 3
      %s526 = smul.addr %s525, 4
      %s527 = scalar_lea.vmem [#allocation2], %s526
      %v528 = vld [vmem:[%s527] sm:$0xf]
      %v529 = vld [vmem:[%s527 + $0x4] sm:$0xf]
      %v530 = vld [vmem:[%s527 + $0x8] sm:$0x3]
      %s531 = scalar_lea.vmem %s2, 48
      %v532 = vld [vmem:[%s531] sm:$0xf]
      %v533 = vld [vmem:[%s531 + $0x4] sm:$0xf]
      %v536 = vunpack.c.l.b16 %v528
      %v537 = vunpack.c.l.b16 %v529
      %v538 = vpack.c.b16 %v537, %v536
      %v541 = vunpack.c.l.b16 %v532
      %v542 = vunpack.c.l.b16 %v533
      %v543 = vpack.c.b16 %v542, %v541
      %v546 = vsel %vm184, %v538, 0
      %548 = vmatprep.subr.bf16.mxu0 0
      %549 = vmatpush1.bf16.msra.mxu0 %v543
      %550 = vmatprep.subr.bf16.mxu0 0
      %551 = vmatpush1.bf16.msra.mxu0 0
      %552 = vmatprep.subr.bf16.mxu0 0
      %553 = vmatpush1.bf16.msra.mxu0 0
      %554 = vmatprep.subr.bf16.mxu0 0
      %555 = vmatpush1.bf16.msra.mxu0 0
      %556 = vmatprep.subr.bf16.mxu0 0
      %557 = vmatpush1.bf16.msra.mxu0 0
      %558 = vmatprep.subr.bf16.mxu0 0
      %559 = vmatpush1.bf16.msra.mxu0 0
      %560 = vmatprep.subr.bf16.mxu0 0
      %561 = vmatpush1.bf16.msra.mxu0 0
      %562 = vmatprep.subr.bf16.mxu0 0
      %563 = vmatpush1.bf16.msra.mxu0 0
      %564 = vmatprep.subr.bf16.mxu0 0
      %565 = vmatpush1.bf16.msra.mxu0 0
      %566 = vmatprep.subr.bf16.mxu0 0
      %567 = vmatpush1.bf16.msra.mxu0 0
      %568 = vmatprep.subr.bf16.mxu0 0
      %569 = vmatpush1.bf16.msra.mxu0 0
      %570 = vmatprep.subr.bf16.mxu0 0
      %571 = vmatpush1.bf16.msra.mxu0 0
      %572 = vmatprep.subr.bf16.mxu0 0
      %573 = vmatpush1.bf16.msra.mxu0 0
      %574 = vmatprep.subr.bf16.mxu0 0
      %575 = vmatpush1.bf16.msra.mxu0 0
      %576 = vmatprep.subr.bf16.mxu0 0
      %577 = vmatpush1.bf16.msra.mxu0 0
      %578 = vmatprep.subr.bf16.mxu0 0
      %579 = vmatpush1.bf16.msra.mxu0 0
      %580 = vmatprep.mubr.bf16.mxu0 0
      %581 = vmatmul.mubr.bf16.gmra.mrb[0].mxu0 %v546
      %v582 = vpop.f32.mrb[0].mxu0
      %v583 = vadd.f32 0.0, %v582
      %v584 = vpop.f32.mrb[0].mxu0
      %v585 = vpop.f32.mrb[0].mxu0
      %v586 = vadd.f32 0.0, %v585
      %v587 = vpop.f32.mrb[0].mxu0
      %588 = vdwg.mxu0
      %v589 = vadd.f32 %v522, %v583
      %v590 = vadd.f32 %v523, %v586
      %s591 = scalar_lea.vmem %s2, 56
      %v592 = vld [vmem:[%s591] sm:$0xf]
      %v593 = vld [vmem:[%s591 + $0x4] sm:$0xf]
      %v595 = vunpack.c.l.b16 %v530
      %v596 = vpack.c.b16 %v595, %v595
      %v597 = vrot.slane %v538, 1
      %v598 = vrot.slane %v596, 1
      %v599 = vsel %vm174, %v597, %v598
      %v602 = vunpack.c.l.b16 %v592
      %v603 = vunpack.c.l.b16 %v593
      %v604 = vpack.c.b16 %v603, %v602
      %v607 = vsel %vm184, %v599, 0
      %609 = vmatprep.subr.bf16.mxu0 0
      %610 = vmatpush1.bf16.msra.mxu0 %v604
      %611 = vmatprep.subr.bf16.mxu0 0
      %612 = vmatpush1.bf16.msra.mxu0 0
      %613 = vmatprep.subr.bf16.mxu0 0
      %614 = vmatpush1.bf16.msra.mxu0 0
      %615 = vmatprep.subr.bf16.mxu0 0
      %616 = vmatpush1.bf16.msra.mxu0 0
      %617 = vmatprep.subr.bf16.mxu0 0
      %618 = vmatpush1.bf16.msra.mxu0 0
      %619 = vmatprep.subr.bf16.mxu0 0
      %620 = vmatpush1.bf16.msra.mxu0 0
      %621 = vmatprep.subr.bf16.mxu0 0
      %622 = vmatpush1.bf16.msra.mxu0 0
      %623 = vmatprep.subr.bf16.mxu0 0
      %624 = vmatpush1.bf16.msra.mxu0 0
      %625 = vmatprep.subr.bf16.mxu0 0
      %626 = vmatpush1.bf16.msra.mxu0 0
      %627 = vmatprep.subr.bf16.mxu0 0
      %628 = vmatpush1.bf16.msra.mxu0 0
      %629 = vmatprep.subr.bf16.mxu0 0
      %630 = vmatpush1.bf16.msra.mxu0 0
      %631 = vmatprep.subr.bf16.mxu0 0
      %632 = vmatpush1.bf16.msra.mxu0 0
      %633 = vmatprep.subr.bf16.mxu0 0
      %634 = vmatpush1.bf16.msra.mxu0 0
      %635 = vmatprep.subr.bf16.mxu0 0
      %636 = vmatpush1.bf16.msra.mxu0 0
      %637 = vmatprep.subr.bf16.mxu0 0
      %638 = vmatpush1.bf16.msra.mxu0 0
      %639 = vmatprep.subr.bf16.mxu0 0
      %640 = vmatpush1.bf16.msra.mxu0 0
      %641 = vmatprep.mubr.bf16.mxu0 0
      %642 = vmatmul.mubr.bf16.gmra.mrb[0].mxu0 %v607
      %v643 = vpop.f32.mrb[0].mxu0
      %v644 = vadd.f32 0.0, %v643
      %v645 = vpop.f32.mrb[0].mxu0
      %v646 = vpop.f32.mrb[0].mxu0
      %v647 = vadd.f32 0.0, %v646
      %v648 = vpop.f32.mrb[0].mxu0
      %649 = vdwg.mxu0
      %v650 = vadd.f32 %v589, %v644
      %v651 = vadd.f32 %v590, %v647
      %s652 = scalar_lea.vmem %s2, 64
      %v653 = vld [vmem:[%s652] sm:$0xf]
      %v654 = vld [vmem:[%s652 + $0x4] sm:$0xf]
      %v655 = vrot.slane %v538, 2
      %v656 = vrot.slane %v596, 2
      %v657 = vsel %vm282, %v655, %v656
      %v660 = vunpack.c.l.b16 %v653
      %v661 = vunpack.c.l.b16 %v654
      %v662 = vpack.c.b16 %v661, %v660
      %v665 = vsel %vm184, %v657, 0
      %667 = vmatprep.subr.bf16.mxu0 0
      %668 = vmatpush1.bf16.msra.mxu0 %v662
      %669 = vmatprep.subr.bf16.mxu0 0
      %670 = vmatpush1.bf16.msra.mxu0 0
      %671 = vmatprep.subr.bf16.mxu0 0
      %672 = vmatpush1.bf16.msra.mxu0 0
      %673 = vmatprep.subr.bf16.mxu0 0
      %674 = vmatpush1.bf16.msra.mxu0 0
      %675 = vmatprep.subr.bf16.mxu0 0
      %676 = vmatpush1.bf16.msra.mxu0 0
      %677 = vmatprep.subr.bf16.mxu0 0
      %678 = vmatpush1.bf16.msra.mxu0 0
      %679 = vmatprep.subr.bf16.mxu0 0
      %680 = vmatpush1.bf16.msra.mxu0 0
      %681 = vmatprep.subr.bf16.mxu0 0
      %682 = vmatpush1.bf16.msra.mxu0 0
      %683 = vmatprep.subr.bf16.mxu0 0
      %684 = vmatpush1.bf16.msra.mxu0 0
      %685 = vmatprep.subr.bf16.mxu0 0
      %686 = vmatpush1.bf16.msra.mxu0 0
      %687 = vmatprep.subr.bf16.mxu0 0
      %688 = vmatpush1.bf16.msra.mxu0 0
      %689 = vmatprep.subr.bf16.mxu0 0
      %690 = vmatpush1.bf16.msra.mxu0 0
      %691 = vmatprep.subr.bf16.mxu0 0
      %692 = vmatpush1.bf16.msra.mxu0 0
      %693 = vmatprep.subr.bf16.mxu0 0
      %694 = vmatpush1.bf16.msra.mxu0 0
      %695 = vmatprep.subr.bf16.mxu0 0
      %696 = vmatpush1.bf16.msra.mxu0 0
      %697 = vmatprep.subr.bf16.mxu0 0
      %698 = vmatpush1.bf16.msra.mxu0 0
      %699 = vmatprep.mubr.bf16.mxu0 0
      %700 = vmatmul.mubr.bf16.gmra.mrb[0].mxu0 %v665
      %v701 = vpop.f32.mrb[0].mxu0
      %v702 = vadd.f32 0.0, %v701
      %v703 = vpop.f32.mrb[0].mxu0
      %v704 = vpop.f32.mrb[0].mxu0
      %v705 = vadd.f32 0.0, %v704
      %v706 = vpop.f32.mrb[0].mxu0
      %707 = vdwg.mxu0
      %v708 = vadd.f32 %v650, %v702
      %v709 = vadd.f32 %v651, %v705
      %v711 = vlaneseq
      %v712 = vshrl.u32 %v711, 7
      %v713 = vsub.s32 0, %v712
      %v714 = vrot.slane %v148, %v713
      %v716 = vadd.f32 %v708, %v714
      %v717 = vadd.f32 %v709, %v714
      %v718 = vmax.f32 %v716, 0.0
      %v719 = vmax.f32 %v717, 0.0
      %s720 = smul.u32 %s150, 16
      %s721 = scalar_lea.vmem [#allocation3], %s720
      %vm722 = vcmask 195584
      %723 = vst.msk [vmem:[%s721] sm:$0xff] %vm722, %v718
      %724 = vst.msk [vmem:[%s721 + $0x8] sm:$0xff] %vm722, %v719
    $region22: #{tpu_custom_call.1} parent=1 // loop_footer
      %s154 = sadd.s32 1, %s150
    $region23: #{tpu_custom_call.1} parent=1 // loop_footer_branch
      %149 = sbr.rel target = $region19
    $region24: #{tpu_custom_call.1} parent=1 // loop_exit
      _
    // Predicated region
    $region25: #{tpu_custom_call.1} parent=1 // pred_check
      _
    $region26: #{tpu_custom_call.1} parent=1 // pred_check_branch
      %726 = sbr.rel (0) target = $region28
    $region27: #{tpu_custom_call.1} parent=1 // pred_region
      %s728 = ssub.s32 3072, 3072
      %729 = vsyncadd [#allocation4], %s728
      %s730 = sshll.u32 [#allocation3], 4
      %s731 = int_to_ptr.vmem [resolvable:$true] %s730
      %736 = dma.vmem_to_hbm [thread:$0]  %s731, 3072, %s4, [#allocation4], 128, 128, 8
    $region28: #{tpu_custom_call.1} parent=1 // pred_fallthru
      _
    // Predicated region
    $region29: #{tpu_custom_call.1} parent=1 // pred_check
      _
    $region30: #{tpu_custom_call.1} parent=1 // pred_check_branch
      %738 = sbr.rel (0) target = $region32
    $region31: #{tpu_custom_call.1} parent=1 // pred_region
      %739 = dma.done [#allocation4], 3072
    $region32: #{tpu_custom_call.1} parent=1 // pred_fallthru
      _
    %740 = vsyncpa [#allocation4], 1

</llo_original>
